<compile_context>
chip_gen: v6e
topology: v6e:2x2x1
jax: 0.10.0
libtpu: 0.0.40
codegen_flags: <defaults>
</compile_context>

<pallas_src>
import jax
import jax.numpy as jnp
from jax.experimental import pallas as pl
from jax.experimental.pallas import tpu as pltpu


def convblock_kernel(alpha_ref,                      # SMEM (1,) f32: min(warmup, 1)
                     x_ref,                          # [Bb, C, T] f32 (native NCL block)
                     w1_ref,                         # [C, H]  bf16  pointwise1
                     b1s_ref,                        # [1, H]  f32   beta1 / s1  (BN1 shift, scale folded into taps)
                     wdw_ref,                        # [K, H]  f32   depthwise taps * s1
                     w2_ref,                         # [H, C]  bf16  pointwise2 with BN2 scale folded
                     b2_ref,                         # [1, C]  f32   BN2 shift pushed through pointwise2
                     wse1_ref, bse1_ref,             # [C, C8], [1, C8] f32  SE fc1
                     wse2_ref, bse2_ref,             # [C8, C], [1, C]  f32  SE fc2
                     out_ref):                       # [Bb, C, T] f32 (native NCL block)
    Bb, C, T = x_ref.shape
    K = wdw_ref.shape[0]
    pad = (K - 1) // 2
    R = Bb * T

    # ---- NCL -> NLC inside the kernel (XLU transpose); x is not kept live ----
    x2 = jnp.swapaxes(x_ref[...], 1, 2).reshape(R, C)               # [R, C]

    # ---- pointwise1 (bf16 MXU, f32 acc) -> ReLU -> BN1 (scale folded away) ---
    h = jnp.dot(x2.astype(w1_ref.dtype), w1_ref[...],
                preferred_element_type=jnp.float32)                 # [R, H]
    hb = jnp.maximum(h, 0.0) + b1s_ref[...]                         # relu(h) + beta1/s1

    # ---- depthwise conv over time: XLU roll per tap + boundary mask ----------
    # taps are pre-scaled by s1, so (relu*s1 + b1)*w == hb*(s1*w); zero-padded
    # boundary positions are masked to 0 before the tap multiply, exactly like
    # the module's zero padding of the BN1 output.
    t_idx = jax.lax.broadcasted_iota(jnp.int32, (Bb, T, 1), 1).reshape(R, 1)
    acc = hb * wdw_ref[pad:pad + 1, :]                              # center tap
    for k in range(K):                                              # static unroll
        off = k - pad
        if off == 0:
            continue
        shifted = pltpu.roll(hb, shift=(-off) % R, axis=0)          # XLU rotate (sublanes)
        valid = jnp.logical_and(t_idx + off >= 0, t_idx + off < T)  # time + batch boundaries
        acc = acc + jnp.where(valid, shifted, 0.0) * wdw_ref[k:k + 1, :]
    d = jnp.maximum(acc, 0.0)                                       # ReLU (BN2 folded into w2)

    # ---- pointwise2 with BN2 folded (bf16 MXU, f32 acc) ----------------------
    y = jnp.dot(d.astype(w2_ref.dtype), w2_ref[...],
                preferred_element_type=jnp.float32) + b2_ref[...]   # [R, C]
    y3 = y.reshape(Bb, T, C)

    # ---- SE: mean over time -> FC -> ReLU -> FC -> sigmoid (FCs on the MXU) --
    m = jnp.mean(y3, axis=1)                                        # [Bb, C]
    z = jnp.maximum(jnp.dot(m, wse1_ref[...],
                            preferred_element_type=jnp.float32) + bse1_ref[...], 0.0)
    g = jax.nn.sigmoid(jnp.dot(z, wse2_ref[...],
                               preferred_element_type=jnp.float32) + bse2_ref[...])
    g = g * alpha_ref[0]                                            # warmup folded into gate

    # dropout(p=0.0) == identity; residual add in native NCL layout.
    contrib = y3 * g[:, None, :]                                    # [Bb, T, C]
    out_ref[...] = x_ref[...] + jnp.swapaxes(contrib, 1, 2)         # back to [Bb, C, T]


def prepare_params(params, matmul_dtype=jnp.bfloat16, eps=1e-5):
    """Fold inference-mode BatchNorms and produce kernel-layout weights.

    All folds are mathematically exact in f32 (the only deliberate deviation
    is casting the two big pointwise weights to bf16 for the MXU).
    """
    f32 = jnp.float32
    s1 = params["gamma1"] / jnp.sqrt(params["var1"] + eps)              # [H]
    b1 = params["beta1"] - params["mean1"] * s1
    s2 = params["gamma2"] / jnp.sqrt(params["var2"] + eps)              # [H]
    b2 = params["beta2"] - params["mean2"] * s2
    s1_safe = jnp.where(jnp.abs(s1) > 1e-12, s1, 1e-12)                 # PyTorch-style guard

    w1_t = params["w1"].T.astype(matmul_dtype)                          # [C, H]
    b1s = (b1 / s1_safe).astype(f32).reshape(1, -1)                     # [1, H]
    wdwf = (params["wdw"].T * s1[None, :]).astype(f32)                  # [K, H] taps * s1
    w2_t = params["w2"].T.astype(f32)                                   # [H, C]
    w2f = (s2[:, None] * w2_t).astype(matmul_dtype)                     # [H, C] BN2 scale folded
    b2f = (b2 @ w2_t).astype(f32).reshape(1, -1)                        # [1, C] BN2 shift folded
    return dict(
        w1=w1_t, b1s=b1s, wdw=wdwf, w2=w2f, b2=b2f,
        wse1=params["wse1"].T.astype(f32),                              # [C, C8]
        bse1=params["bse1"].astype(f32).reshape(1, -1),                 # [1, C8]
        wse2=params["wse2"].T.astype(f32),                              # [C8, C]
        bse2=params["bse2"].astype(f32).reshape(1, -1),                 # [1, C]
    )


def conv_block_forward(inputs, input_lengths, warmup, params, *,
                       batch_block=None, matmul_dtype=jnp.bfloat16):
    """inputs: [B, C, T] f32 (PyTorch NCL), input_lengths: [B], warmup: float or traced scalar."""
    B, C, T = inputs.shape
    K = params["wdw"].shape[1]
    H = params["wdw"].shape[0]
    assert K % 2 == 1, "only odd kernel_size supported (module's 'same' padding)"

    prep = prepare_params(params, matmul_dtype)
    x = inputs.astype(jnp.float32)                                   # stays in NCL: no wrapper transpose

    # warmup as a runtime SMEM scalar -> no recompilation across warmup values
    alpha = jnp.minimum(jnp.asarray(warmup, dtype=jnp.float32), 1.0).reshape(1)

    # ---- generation-aware batch-slab sizing ---------------------------------
    try:
        phys_vmem = int(pltpu.get_tpu_info().vmem_capacity_bytes)    # 128 MiB v5e/v6e, 64 MiB v7x
    except Exception:                                                # pragma: no cover (emulator etc.)
        phys_vmem = 64 << 20
    budget = int(min(phys_vmem // 2, 48 << 20))                      # headroom under physical VMEM

    # Per-batch-element live f32 bytes: double-buffered x/out blocks (2x2xCT)
    # plus the temporaries (x_nlc, y, contrib ~3xCT; h/hb/shifted/mask/acc/d ~6xHT).
    per_batch_bytes = 4 * T * (7 * C + 6 * H)
    if batch_block is None:
        bb_vmem = max(1, budget // max(per_batch_bytes, 1))
        bb_steps = max(1, -(-B // 4))      # keep >= ~4 grid steps (pipelining + v7x dual-TC)
        batch_block = int(max(1, min(B, bb_vmem, bb_steps)))
    nb = pl.cdiv(B, batch_block)
    Bp = nb * batch_block
    if Bp != B:
        x = jnp.pad(x, ((0, Bp - B), (0, 0), (0, 0)))

    def full(a):
        return pl.BlockSpec(a.shape, lambda i: (0,) * a.ndim)

    xspec = pl.BlockSpec((batch_block, C, T), lambda i: (i, 0, 0))   # NCL block; (C,T) full minor dims
    smem_spec = pl.BlockSpec(memory_space=pltpu.MemorySpace.SMEM)

    weights = (prep["w1"], prep["b1s"], prep["wdw"], prep["w2"], prep["b2"],
               prep["wse1"], prep["bse1"], prep["wse2"], prep["bse2"])

    out = pl.pallas_call(
        convblock_kernel,
        out_shape=jax.ShapeDtypeStruct((Bp, C, T), jnp.float32),
        grid=(nb,),
        in_specs=[smem_spec, xspec] + [full(a) for a in weights],
        out_specs=xspec,
        compiler_params=pltpu.CompilerParams(
            dimension_semantics=("parallel",),        # shard batch-blocks over v7x's two TCs
            vmem_limit_bytes=budget),
    )(alpha, x, *weights)

    return out[:B], input_lengths


def conv_block_reference(inputs, warmup, params, matmul_dtype=jnp.bfloat16):
    """Pure-JAX reference of the same math (same folds / bf16 MXU operands)."""
    prep = prepare_params(params, matmul_dtype)
    x = jnp.transpose(inputs, (0, 2, 1)).astype(jnp.float32)        # [B, T, C]
    h = jnp.einsum("btc,ch->bth", x.astype(matmul_dtype), prep["w1"],
                   preferred_element_type=jnp.float32)
    hb = jnp.maximum(h, 0.0) + prep["b1s"][0]
    K = prep["wdw"].shape[0]
    pad = (K - 1) // 2
    T = hb.shape[1]
    hp = jnp.pad(hb, ((0, 0), (pad, pad), (0, 0)))                   # zero 'same' padding
    acc = hp[:, pad:pad + T, :] * prep["wdw"][pad]
    for k in range(K):
        if k == pad:
            continue
        acc = acc + hp[:, k:k + T, :] * prep["wdw"][k]
    d = jnp.maximum(acc, 0.0)
    y = jnp.einsum("bth,hc->btc", d.astype(matmul_dtype), prep["w2"],
                   preferred_element_type=jnp.float32) + prep["b2"][0]
    m = jnp.mean(y, axis=1)                                          # [B, C]
    z = jnp.maximum(m @ prep["wse1"] + prep["bse1"][0], 0.0)
    g = jax.nn.sigmoid(z @ prep["wse2"] + prep["bse2"][0])
    alpha = jnp.minimum(jnp.asarray(warmup, jnp.float32), 1.0)
    out = x + y * (alpha * g)[:, None, :]
    return jnp.transpose(out, (0, 2, 1))                             # back to [B, C, T]


def init_params(key, C, H, K):
    C8 = C // 8
    ks = jax.random.split(key, 16)
    f32 = jnp.float32
    return dict(
        w1=(0.1 * jax.random.normal(ks[0], (H, C))).astype(f32),      # Conv1d(C,H,1) weight
        wdw=(0.1 * jax.random.normal(ks[1], (H, K))).astype(f32),     # depthwise weight [H,1,K]->[H,K]
        w2=(0.1 * jax.random.normal(ks[2], (C, H))).astype(f32),      # Conv1d(H,C,1) weight
        gamma1=(1.0 + 0.1 * jax.random.normal(ks[3], (H,))).astype(f32),
        beta1=(0.1 * jax.random.normal(ks[4], (H,))).astype(f32),
        mean1=(0.1 * jax.random.normal(ks[5], (H,))).astype(f32),
        var1=jax.random.uniform(ks[6], (H,), minval=0.5, maxval=1.5).astype(f32),
        gamma2=(1.0 + 0.1 * jax.random.normal(ks[7], (H,))).astype(f32),
        beta2=(0.1 * jax.random.normal(ks[8], (H,))).astype(f32),
        mean2=(0.1 * jax.random.normal(ks[9], (H,))).astype(f32),
        var2=jax.random.uniform(ks[10], (H,), minval=0.5, maxval=1.5).astype(f32),
        wse1=(0.1 * jax.random.normal(ks[11], (C8, C))).astype(f32),  # SE Conv1d(C,C/8,1)
        bse1=(0.1 * jax.random.normal(ks[12], (C8,))).astype(f32),
        wse2=(0.1 * jax.random.normal(ks[13], (C, C8))).astype(f32),  # SE Conv1d(C/8,C,1)
        bse2=(0.1 * jax.random.normal(ks[14], (C,))).astype(f32),
    )


if __name__ == "__main__":
    B, C, H, T, K = 2, 32, 64, 16, 5      # channels=32, channels_hidden=64, kernel_size=5
    warmup = 0.5

    key = jax.random.PRNGKey(0)
    k_in, k_par = jax.random.split(key)
    inputs = jax.random.normal(k_in, (B, C, T), dtype=jnp.float32)    # [batch, dim, seq] (NCL)
    input_lengths = jnp.full((B,), T, dtype=jnp.int32)
    params = init_params(k_par, C, H, K)

    out, out_len = conv_block_forward(inputs, input_lengths, warmup, params)
    out = jax.block_until_ready(out)

    ref = conv_block_reference(inputs, warmup, params)
    assert out.shape == (B, C, T)
    assert out_len.shape == (B,)
    assert jnp.allclose(out, ref, rtol=2e-3, atol=2e-3), "mismatch vs pure-JAX reference"

    print("KERNEL_OK")
</pallas_src>

<mosaic_0001>
module attributes {stable_mosaic.version = 11 : i64} {
  func.func @convblock_kernel(%arg0: i32, %arg1: memref<1xf32, #tpu.memory_space<smem>>, %arg2: memref<1x32x16xf32, #tpu.memory_space<vmem>>, %arg3: memref<32x64xbf16, #tpu.memory_space<vmem>>, %arg4: memref<1x64xf32, #tpu.memory_space<vmem>>, %arg5: memref<5x64xf32, #tpu.memory_space<vmem>>, %arg6: memref<64x32xbf16, #tpu.memory_space<vmem>>, %arg7: memref<1x32xf32, #tpu.memory_space<vmem>>, %arg8: memref<32x4xf32, #tpu.memory_space<vmem>>, %arg9: memref<1x4xf32, #tpu.memory_space<vmem>>, %arg10: memref<4x32xf32, #tpu.memory_space<vmem>>, %arg11: memref<1x32xf32, #tpu.memory_space<vmem>>, %arg12: memref<1x32x16xf32, #tpu.memory_space<vmem>>) attributes {dimension_semantics = [#tpu.dimension_semantics<parallel>], iteration_bounds = array<i64: 2>, scalar_prefetch = 0 : i64, scratch_operands = 0 : i64, tpu.core_type = #tpu.core_type<tc>, window_params = [{transform_indices = @transform_0, window_bounds = array<i64: 1>}, {transform_indices = @transform_1, window_bounds = array<i64: 1, 32, 16>}, {pipeline_mode = #tpu.pipeline_mode<synchronous>, transform_indices = @transform_2, window_bounds = array<i64: 32, 64>}, {pipeline_mode = #tpu.pipeline_mode<synchronous>, transform_indices = @transform_3, window_bounds = array<i64: 1, 64>}, {pipeline_mode = #tpu.pipeline_mode<synchronous>, transform_indices = @transform_4, window_bounds = array<i64: 5, 64>}, {pipeline_mode = #tpu.pipeline_mode<synchronous>, transform_indices = @transform_5, window_bounds = array<i64: 64, 32>}, {pipeline_mode = #tpu.pipeline_mode<synchronous>, transform_indices = @transform_6, window_bounds = array<i64: 1, 32>}, {pipeline_mode = #tpu.pipeline_mode<synchronous>, transform_indices = @transform_7, window_bounds = array<i64: 32, 4>}, {pipeline_mode = #tpu.pipeline_mode<synchronous>, transform_indices = @transform_8, window_bounds = array<i64: 1, 4>}, {pipeline_mode = #tpu.pipeline_mode<synchronous>, transform_indices = @transform_9, window_bounds = array<i64: 4, 32>}, {pipeline_mode = #tpu.pipeline_mode<synchronous>, transform_indices = @transform_10, window_bounds = array<i64: 1, 32>}, {transform_indices = @transform_11, window_bounds = array<i64: 1, 32, 16>}]} {
    %c0 = arith.constant 0 : index
    %c0_0 = arith.constant 0 : index
    %c0_1 = arith.constant 0 : index
    %0 = vector.load %arg2[%c0, %c0_0, %c0_1] : memref<1x32x16xf32, #tpu.memory_space<vmem>>, vector<1x32x16xf32>
    %1 = tpu.transpose %0, [0, 2, 1] : vector<1x32x16xf32> -> vector<1x16x32xf32>
    %2 = vector.shape_cast %1 : vector<1x16x32xf32> to vector<16x32xf32>
    %3 = arith.truncf %2 : vector<16x32xf32> to vector<16x32xbf16>
    %c0_2 = arith.constant 0 : index
    %c0_3 = arith.constant 0 : index
    %4 = vector.load %arg3[%c0_2, %c0_3] : memref<32x64xbf16, #tpu.memory_space<vmem>>, vector<32x64xbf16>
    %cst = arith.constant dense<0.000000e+00> : vector<16x64xf32>
    %5 = tpu.matmul %3, %4, %cst {dimension_numbers = #tpu.dot_dimension_numbers<[1], [0], [0], [1], [0, 0, 1, 1], [], []>} : vector<16x32xbf16>, vector<32x64xbf16>, vector<16x64xf32> -> vector<16x64xf32>
    %cst_4 = arith.constant 0.000000e+00 : f32
    %6 = vector.broadcast %cst_4 : f32 to vector<16x64xf32>
    %7 = arith.maximumf %5, %6 : vector<16x64xf32>
    %c0_5 = arith.constant 0 : index
    %c0_6 = arith.constant 0 : index
    %8 = vector.load %arg4[%c0_5, %c0_6] : memref<1x64xf32, #tpu.memory_space<vmem>>, vector<1x64xf32>
    %9 = vector.broadcast %8 : vector<1x64xf32> to vector<16x64xf32>
    %10 = arith.addf %7, %9 : vector<16x64xf32>
    %11 = tpu.iota {dimensions = array<i32: 1>} : vector<1x16x1xi32>
    %12 = vector.shape_cast %11 : vector<1x16x1xi32> to vector<16x1xi32>
    %c2 = arith.constant 2 : index
    %c0_7 = arith.constant 0 : index
    %13 = vector.load %arg5[%c2, %c0_7] : memref<5x64xf32, #tpu.memory_space<vmem>>, vector<1x64xf32>
    %14 = vector.broadcast %13 : vector<1x64xf32> to vector<16x64xf32>
    %15 = arith.mulf %10, %14 : vector<16x64xf32>
    %c2_i32 = arith.constant 2 : i32
    %16 = tpu.dynamic_rotate %10 by %c2_i32 dim 0 : vector<16x64xf32>, i32 -> vector<16x64xf32>
    %c-2_i32 = arith.constant -2 : i32
    %17 = vector.broadcast %c-2_i32 : i32 to vector<16x1xi32>
    %18 = arith.addi %12, %17 : vector<16x1xi32>
    %c0_i32 = arith.constant 0 : i32
    %19 = vector.broadcast %c0_i32 : i32 to vector<16x1xi32>
    %20 = arith.cmpi sge, %18, %19 : vector<16x1xi32>
    %c-2_i32_8 = arith.constant -2 : i32
    %21 = vector.broadcast %c-2_i32_8 : i32 to vector<16x1xi32>
    %22 = arith.addi %12, %21 : vector<16x1xi32>
    %c16_i32 = arith.constant 16 : i32
    %23 = vector.broadcast %c16_i32 : i32 to vector<16x1xi32>
    %24 = arith.cmpi slt, %22, %23 : vector<16x1xi32>
    %25 = arith.andi %20, %24 : vector<16x1xi1>
    %cst_9 = arith.constant 0.000000e+00 : f32
    %26 = vector.shape_cast %25 : vector<16x1xi1> to vector<16x1xi1>
    %27 = vector.broadcast %26 : vector<16x1xi1> to vector<16x64xi1>
    %28 = vector.broadcast %cst_9 : f32 to vector<16x64xf32>
    %29 = arith.select %27, %16, %28 : vector<16x64xi1>, vector<16x64xf32>
    %c0_10 = arith.constant 0 : index
    %c0_11 = arith.constant 0 : index
    %30 = vector.load %arg5[%c0_10, %c0_11] : memref<5x64xf32, #tpu.memory_space<vmem>>, vector<1x64xf32>
    %31 = vector.broadcast %30 : vector<1x64xf32> to vector<16x64xf32>
    %32 = arith.mulf %29, %31 : vector<16x64xf32>
    %33 = arith.addf %15, %32 : vector<16x64xf32>
    %c1_i32 = arith.constant 1 : i32
    %34 = tpu.dynamic_rotate %10 by %c1_i32 dim 0 : vector<16x64xf32>, i32 -> vector<16x64xf32>
    %c-1_i32 = arith.constant -1 : i32
    %35 = vector.broadcast %c-1_i32 : i32 to vector<16x1xi32>
    %36 = arith.addi %12, %35 : vector<16x1xi32>
    %c0_i32_12 = arith.constant 0 : i32
    %37 = vector.broadcast %c0_i32_12 : i32 to vector<16x1xi32>
    %38 = arith.cmpi sge, %36, %37 : vector<16x1xi32>
    %c-1_i32_13 = arith.constant -1 : i32
    %39 = vector.broadcast %c-1_i32_13 : i32 to vector<16x1xi32>
    %40 = arith.addi %12, %39 : vector<16x1xi32>
    %c16_i32_14 = arith.constant 16 : i32
    %41 = vector.broadcast %c16_i32_14 : i32 to vector<16x1xi32>
    %42 = arith.cmpi slt, %40, %41 : vector<16x1xi32>
    %43 = arith.andi %38, %42 : vector<16x1xi1>
    %cst_15 = arith.constant 0.000000e+00 : f32
    %44 = vector.shape_cast %43 : vector<16x1xi1> to vector<16x1xi1>
    %45 = vector.broadcast %44 : vector<16x1xi1> to vector<16x64xi1>
    %46 = vector.broadcast %cst_15 : f32 to vector<16x64xf32>
    %47 = arith.select %45, %34, %46 : vector<16x64xi1>, vector<16x64xf32>
    %c1 = arith.constant 1 : index
    %c0_16 = arith.constant 0 : index
    %48 = vector.load %arg5[%c1, %c0_16] : memref<5x64xf32, #tpu.memory_space<vmem>>, vector<1x64xf32>
    %49 = vector.broadcast %48 : vector<1x64xf32> to vector<16x64xf32>
    %50 = arith.mulf %47, %49 : vector<16x64xf32>
    %51 = arith.addf %33, %50 : vector<16x64xf32>
    %c15_i32 = arith.constant 15 : i32
    %52 = tpu.dynamic_rotate %10 by %c15_i32 dim 0 : vector<16x64xf32>, i32 -> vector<16x64xf32>
    %c1_i32_17 = arith.constant 1 : i32
    %53 = vector.broadcast %c1_i32_17 : i32 to vector<16x1xi32>
    %54 = arith.addi %12, %53 : vector<16x1xi32>
    %c0_i32_18 = arith.constant 0 : i32
    %55 = vector.broadcast %c0_i32_18 : i32 to vector<16x1xi32>
    %56 = arith.cmpi sge, %54, %55 : vector<16x1xi32>
    %c1_i32_19 = arith.constant 1 : i32
    %57 = vector.broadcast %c1_i32_19 : i32 to vector<16x1xi32>
    %58 = arith.addi %12, %57 : vector<16x1xi32>
    %c16_i32_20 = arith.constant 16 : i32
    %59 = vector.broadcast %c16_i32_20 : i32 to vector<16x1xi32>
    %60 = arith.cmpi slt, %58, %59 : vector<16x1xi32>
    %61 = arith.andi %56, %60 : vector<16x1xi1>
    %cst_21 = arith.constant 0.000000e+00 : f32
    %62 = vector.shape_cast %61 : vector<16x1xi1> to vector<16x1xi1>
    %63 = vector.broadcast %62 : vector<16x1xi1> to vector<16x64xi1>
    %64 = vector.broadcast %cst_21 : f32 to vector<16x64xf32>
    %65 = arith.select %63, %52, %64 : vector<16x64xi1>, vector<16x64xf32>
    %c3 = arith.constant 3 : index
    %c0_22 = arith.constant 0 : index
    %66 = vector.load %arg5[%c3, %c0_22] : memref<5x64xf32, #tpu.memory_space<vmem>>, vector<1x64xf32>
    %67 = vector.broadcast %66 : vector<1x64xf32> to vector<16x64xf32>
    %68 = arith.mulf %65, %67 : vector<16x64xf32>
    %69 = arith.addf %51, %68 : vector<16x64xf32>
    %c14_i32 = arith.constant 14 : i32
    %70 = tpu.dynamic_rotate %10 by %c14_i32 dim 0 : vector<16x64xf32>, i32 -> vector<16x64xf32>
    %c2_i32_23 = arith.constant 2 : i32
    %71 = vector.broadcast %c2_i32_23 : i32 to vector<16x1xi32>
    %72 = arith.addi %12, %71 : vector<16x1xi32>
    %c0_i32_24 = arith.constant 0 : i32
    %73 = vector.broadcast %c0_i32_24 : i32 to vector<16x1xi32>
    %74 = arith.cmpi sge, %72, %73 : vector<16x1xi32>
    %c2_i32_25 = arith.constant 2 : i32
    %75 = vector.broadcast %c2_i32_25 : i32 to vector<16x1xi32>
    %76 = arith.addi %12, %75 : vector<16x1xi32>
    %c16_i32_26 = arith.constant 16 : i32
    %77 = vector.broadcast %c16_i32_26 : i32 to vector<16x1xi32>
    %78 = arith.cmpi slt, %76, %77 : vector<16x1xi32>
    %79 = arith.andi %74, %78 : vector<16x1xi1>
    %cst_27 = arith.constant 0.000000e+00 : f32
    %80 = vector.shape_cast %79 : vector<16x1xi1> to vector<16x1xi1>
    %81 = vector.broadcast %80 : vector<16x1xi1> to vector<16x64xi1>
    %82 = vector.broadcast %cst_27 : f32 to vector<16x64xf32>
    %83 = arith.select %81, %70, %82 : vector<16x64xi1>, vector<16x64xf32>
    %c4 = arith.constant 4 : index
    %c0_28 = arith.constant 0 : index
    %84 = vector.load %arg5[%c4, %c0_28] : memref<5x64xf32, #tpu.memory_space<vmem>>, vector<1x64xf32>
    %85 = vector.broadcast %84 : vector<1x64xf32> to vector<16x64xf32>
    %86 = arith.mulf %83, %85 : vector<16x64xf32>
    %87 = arith.addf %69, %86 : vector<16x64xf32>
    %cst_29 = arith.constant 0.000000e+00 : f32
    %88 = vector.broadcast %cst_29 : f32 to vector<16x64xf32>
    %89 = arith.maximumf %87, %88 : vector<16x64xf32>
    %90 = arith.truncf %89 : vector<16x64xf32> to vector<16x64xbf16>
    %c0_30 = arith.constant 0 : index
    %c0_31 = arith.constant 0 : index
    %91 = vector.load %arg6[%c0_30, %c0_31] : memref<64x32xbf16, #tpu.memory_space<vmem>>, vector<64x32xbf16>
    %cst_32 = arith.constant dense<0.000000e+00> : vector<16x32xf32>
    %92 = tpu.matmul %90, %91, %cst_32 {dimension_numbers = #tpu.dot_dimension_numbers<[1], [0], [0], [1], [0, 0, 1, 1], [], []>} : vector<16x64xbf16>, vector<64x32xbf16>, vector<16x32xf32> -> vector<16x32xf32>
    %c0_33 = arith.constant 0 : index
    %c0_34 = arith.constant 0 : index
    %93 = vector.load %arg7[%c0_33, %c0_34] : memref<1x32xf32, #tpu.memory_space<vmem>>, vector<1x32xf32>
    %94 = vector.broadcast %93 : vector<1x32xf32> to vector<16x32xf32>
    %95 = arith.addf %92, %94 : vector<16x32xf32>
    %96 = vector.shape_cast %95 : vector<16x32xf32> to vector<1x16x32xf32>
    %cst_35 = arith.constant dense<0.000000e+00> : vector<1x32xf32>
    %97 = vector.multi_reduction <add>, %96, %cst_35 [1] : vector<1x16x32xf32> to vector<1x32xf32>
    %cst_36 = arith.constant 1.600000e+01 : f32
    %98 = vector.broadcast %cst_36 : f32 to vector<1x32xf32>
    %99 = arith.divf %97, %98 : vector<1x32xf32>
    %c0_37 = arith.constant 0 : index
    %c0_38 = arith.constant 0 : index
    %100 = vector.load %arg8[%c0_37, %c0_38] : memref<32x4xf32, #tpu.memory_space<vmem>>, vector<32x4xf32>
    %cst_39 = arith.constant dense<0.000000e+00> : vector<1x4xf32>
    %101 = tpu.matmul %99, %100, %cst_39 {dimension_numbers = #tpu.dot_dimension_numbers<[1], [0], [0], [1], [0, 0, 1, 1], [], []>} : vector<1x32xf32>, vector<32x4xf32>, vector<1x4xf32> -> vector<1x4xf32>
    %c0_40 = arith.constant 0 : index
    %c0_41 = arith.constant 0 : index
    %102 = vector.load %arg9[%c0_40, %c0_41] : memref<1x4xf32, #tpu.memory_space<vmem>>, vector<1x4xf32>
    %103 = arith.addf %101, %102 : vector<1x4xf32>
    %cst_42 = arith.constant 0.000000e+00 : f32
    %104 = vector.broadcast %cst_42 : f32 to vector<1x4xf32>
    %105 = arith.maximumf %103, %104 : vector<1x4xf32>
    %c0_43 = arith.constant 0 : index
    %c0_44 = arith.constant 0 : index
    %106 = vector.load %arg10[%c0_43, %c0_44] : memref<4x32xf32, #tpu.memory_space<vmem>>, vector<4x32xf32>
    %cst_45 = arith.constant dense<0.000000e+00> : vector<1x32xf32>
    %107 = tpu.matmul %105, %106, %cst_45 {dimension_numbers = #tpu.dot_dimension_numbers<[1], [0], [0], [1], [0, 0, 1, 1], [], []>} : vector<1x4xf32>, vector<4x32xf32>, vector<1x32xf32> -> vector<1x32xf32>
    %c0_46 = arith.constant 0 : index
    %c0_47 = arith.constant 0 : index
    %108 = vector.load %arg11[%c0_46, %c0_47] : memref<1x32xf32, #tpu.memory_space<vmem>>, vector<1x32xf32>
    %109 = arith.addf %107, %108 : vector<1x32xf32>
    %110 = arith.negf %109 : vector<1x32xf32>
    %111 = math.exp %110 : vector<1x32xf32>
    %cst_48 = arith.constant 1.000000e+00 : f32
    %112 = vector.broadcast %cst_48 : f32 to vector<1x32xf32>
    %113 = arith.addf %112, %111 : vector<1x32xf32>
    %114 = arith.divf %112, %113 : vector<1x32xf32>
    %c0_49 = arith.constant 0 : index
    %115 = memref.load %arg1[%c0_49] : memref<1xf32, #tpu.memory_space<smem>>
    %116 = vector.broadcast %115 : f32 to vector<1x32xf32>
    %117 = arith.mulf %114, %116 : vector<1x32xf32>
    %118 = vector.shape_cast %117 : vector<1x32xf32> to vector<1x1x32xf32>
    %119 = vector.broadcast %118 : vector<1x1x32xf32> to vector<1x16x32xf32>
    %120 = arith.mulf %96, %119 : vector<1x16x32xf32>
    %c0_50 = arith.constant 0 : index
    %c0_51 = arith.constant 0 : index
    %c0_52 = arith.constant 0 : index
    %121 = vector.load %arg2[%c0_50, %c0_51, %c0_52] : memref<1x32x16xf32, #tpu.memory_space<vmem>>, vector<1x32x16xf32>
    %122 = tpu.transpose %120, [0, 2, 1] : vector<1x16x32xf32> -> vector<1x32x16xf32>
    %123 = arith.addf %121, %122 : vector<1x32x16xf32>
    %c0_53 = arith.constant 0 : index
    %c0_54 = arith.constant 0 : index
    %c0_55 = arith.constant 0 : index
    %124 = vector.load %arg12[%c0_53, %c0_54, %c0_55] : memref<1x32x16xf32, #tpu.memory_space<vmem>>, vector<1x32x16xf32>
    tpu.vector_store %arg12[%c0_53, %c0_54, %c0_55], %123 {strides = array<i32>} : memref<1x32x16xf32, #tpu.memory_space<vmem>>, vector<1x32x16xf32>,
    return
  }
  func.func @transform_0(%arg0: i32) -> i32 {
    %c0_i32 = arith.constant 0 : i32
    %c0_i32_0 = arith.constant 0 : i32
    return %c0_i32 : i32
  }
  func.func @transform_1(%arg0: i32) -> (i32, i32, i32) {
    %c0_i32 = arith.constant 0 : i32
    %c0_i32_0 = arith.constant 0 : i32
    %c0_i32_1 = arith.constant 0 : i32
    return %arg0, %c0_i32, %c0_i32_0 : i32, i32, i32
  }
  func.func @transform_2(%arg0: i32) -> (i32, i32) {
    %c0_i32 = arith.constant 0 : i32
    %c0_i32_0 = arith.constant 0 : i32
    %c0_i32_1 = arith.constant 0 : i32
    return %c0_i32, %c0_i32_0 : i32, i32
  }
  func.func @transform_3(%arg0: i32) -> (i32, i32) {
    %c0_i32 = arith.constant 0 : i32
    %c0_i32_0 = arith.constant 0 : i32
    %c0_i32_1 = arith.constant 0 : i32
    return %c0_i32, %c0_i32_0 : i32, i32
  }
  func.func @transform_4(%arg0: i32) -> (i32, i32) {
    %c0_i32 = arith.constant 0 : i32
    %c0_i32_0 = arith.constant 0 : i32
    %c0_i32_1 = arith.constant 0 : i32
    return %c0_i32, %c0_i32_0 : i32, i32
  }
  func.func @transform_5(%arg0: i32) -> (i32, i32) {
    %c0_i32 = arith.constant 0 : i32
    %c0_i32_0 = arith.constant 0 : i32
    %c0_i32_1 = arith.constant 0 : i32
    return %c0_i32, %c0_i32_0 : i32, i32
  }
  func.func @transform_6(%arg0: i32) -> (i32, i32) {
    %c0_i32 = arith.constant 0 : i32
    %c0_i32_0 = arith.constant 0 : i32
    %c0_i32_1 = arith.constant 0 : i32
    return %c0_i32, %c0_i32_0 : i32, i32
  }
  func.func @transform_7(%arg0: i32) -> (i32, i32) {
    %c0_i32 = arith.constant 0 : i32
    %c0_i32_0 = arith.constant 0 : i32
    %c0_i32_1 = arith.constant 0 : i32
    return %c0_i32, %c0_i32_0 : i32, i32
  }
  func.func @transform_8(%arg0: i32) -> (i32, i32) {
    %c0_i32 = arith.constant 0 : i32
    %c0_i32_0 = arith.constant 0 : i32
    %c0_i32_1 = arith.constant 0 : i32
    return %c0_i32, %c0_i32_0 : i32, i32
  }
  func.func @transform_9(%arg0: i32) -> (i32, i32) {
    %c0_i32 = arith.constant 0 : i32
    %c0_i32_0 = arith.constant 0 : i32
    %c0_i32_1 = arith.constant 0 : i32
    return %c0_i32, %c0_i32_0 : i32, i32
  }
  func.func @transform_10(%arg0: i32) -> (i32, i32) {
    %c0_i32 = arith.constant 0 : i32
    %c0_i32_0 = arith.constant 0 : i32
    %c0_i32_1 = arith.constant 0 : i32
    return %c0_i32, %c0_i32_0 : i32, i32
  }
  func.func @transform_11(%arg0: i32) -> (i32, i32, i32) {
    %c0_i32 = arith.constant 0 : i32
    %c0_i32_0 = arith.constant 0 : i32
    %c0_i32_1 = arith.constant 0 : i32
    return %arg0, %c0_i32, %c0_i32_0 : i32, i32, i32
  }
}

</mosaic_0001>

<llo_original>
// kernel: tpu_custom_call.1
$region0: #{tpu_custom_call.1}
  #allocation0 [shape = 'u32[]', space=smem, size = 0x4, offset = 0x4, fixed_abs, tag = 'smem constant byte address 0x4 - core index']
  #allocation1 [shape = 'u32[144,128]{1,0:T(1,128)}', space=vmem, size = 0x12000, scoped, tag = 'internal scratch']
  #allocation2 [shape = 'f32[1]{0:T(128)S(6)}', space=smem, size = 0x200, scoped, tag = 'scoped memory for tpu_custom_call.1']
  %s0 = inlined_call_operand.<no memory space> [shape: f32[1], index: 0, kind: input, shape index: {}]
  %s1 = inlined_call_operand.vmem [shape: f32[2,32,16], index: 1, kind: input, shape index: {}]
  %s2 = inlined_call_operand.vmem [shape: bf16[32,64], index: 2, kind: input, shape index: {}]
  %s3 = inlined_call_operand.vmem [shape: f32[1,64], index: 3, kind: input, shape index: {}]
  %s4 = inlined_call_operand.vmem [shape: f32[5,64], index: 4, kind: input, shape index: {}]
  %s5 = inlined_call_operand.vmem [shape: bf16[64,32], index: 5, kind: input, shape index: {}]
  %s6 = inlined_call_operand.vmem [shape: f32[1,32], index: 6, kind: input, shape index: {}]
  %s7 = inlined_call_operand.vmem [shape: f32[32,4], index: 7, kind: input, shape index: {}]
  %s8 = inlined_call_operand.vmem [shape: f32[1,4], index: 8, kind: input, shape index: {}]
  %s9 = inlined_call_operand.vmem [shape: f32[4,32], index: 9, kind: input, shape index: {}]
  %s10 = inlined_call_operand.vmem [shape: f32[1,32], index: 10, kind: input, shape index: {}]
  %s11 = inlined_call_operand.vmem [shape: f32[2,32,16], index: 11, kind: output, shape index: {}]
  %s12 = sld [smem:[#allocation0]]
  $region77: #{tpu_custom_call.1} parent=0
    _
  %s14 = ssub.s32 1, %s12
  %s15 = scalar_select 0, %s14, %s12
  %16 = sst [smem:[#allocation2]] %s0
  loop: start=0, step=1, limit=4
  $region2: #{tpu_custom_call.1} parent=0 // loop_pre_header
    _
  $region3: #{tpu_custom_call.1} parent=0 // loop_header
    %s18 = sphi 0, %s22
    %p19 = scmp.ge.s32.totalorder %s18, 4
    %s26 = sphi 0, %s26
    %s28 = sphi 0, %s26
    %s29 = sphi 0, %s28
    %s43 = sphi 0, %s29
    %s49 = sphi 0, %s51
    %s52 = sphi 0, %s49
    %s53 = sphi 0, %s52
    %s69 = sphi 0, %s53
    %s73 = sphi 0, %s73
    %s75 = sphi 0, %s73
    %s76 = sphi 0, %s75
    %s90 = sphi 0, %s76
    %s94 = sphi 0, %s94
    %s96 = sphi 0, %s94
    %s97 = sphi 0, %s96
    %s111 = sphi 0, %s97
    %s115 = sphi 0, %s115
    %s117 = sphi 0, %s115
    %s118 = sphi 0, %s117
    %s132 = sphi 0, %s118
    %s136 = sphi 0, %s136
    %s138 = sphi 0, %s136
    %s139 = sphi 0, %s138
    %s153 = sphi 0, %s139
    %s157 = sphi 0, %s157
    %s159 = sphi 0, %s157
    %s160 = sphi 0, %s159
    %s174 = sphi 0, %s160
    %s178 = sphi 0, %s178
    %s180 = sphi 0, %s178
    %s181 = sphi 0, %s180
    %s195 = sphi 0, %s181
    %s199 = sphi 0, %s199
    %s201 = sphi 0, %s199
    %s202 = sphi 0, %s201
    %s216 = sphi 0, %s202
    %s220 = sphi 0, %s220
    %s222 = sphi 0, %s220
    %s223 = sphi 0, %s222
    %s237 = sphi 0, %s223
    %s241 = sphi 0, %s241
    %s243 = sphi 0, %s241
    %s244 = sphi 0, %s243
    %s258 = sphi 0, %s244
    %s264 = sphi 0, %s266
    %s267 = sphi 0, %s264
    %s268 = sphi 0, %s267
    %s284 = sphi 0, %s268
  $region4: #{tpu_custom_call.1} parent=0 // loop_header_branch
    %21 = sbr.rel (%p19) target = $region8
  $region5: #{tpu_custom_call.1} parent=0 // loop_body
    %s23 = ssub.s32 %s18, 1
    %s24 = ssub.s32 %s18, 2
    %s25 = sadd.s32 %s18, 1
    %s27 = sadd.s32 %s26, 1
    %p30 = scmp.eq.s32.totalorder %s18, 1
    %p31 = scmp.ne.s32.totalorder %s26, %s28
    %p32 = scmp.eq.s32.totalorder %s18, 0
    %p33 = por %p31, %p32
    %p34 = scmp.ne.s32.totalorder %s26, %s28
    %p35 = scmp.eq.s32.totalorder %s23, 1
    %p36 = por %p34, %p35
    %p37 = scmp.ne.s32.totalorder %s28, %s29
    %p38 = scmp.eq.s32.totalorder %s23, 0
    %p39 = por %p37, %p38
    %p40 = scmp.ne.s32.totalorder %s28, %s29
    %p41 = scmp.eq.s32.totalorder %s24, 1
    %p42 = por %p40, %p41
    %p44 = scmp.ne.s32.totalorder %s29, %s43
    %p45 = scmp.eq.s32.totalorder %s24, 0
    %p46 = por %p44, %p45
    %s47 = ssub.s32 %s18, %s25
    %p48 = scmp.eq.s32.totalorder %s47, 0
    %s50 = sadd.s32 %s49, 1
    %s51 = scalar_select %p48, %s49, %s50
    %p54 = pneg %p48
    %p55 = scmp.eq.s32.totalorder %s18, 1
    %p56 = por %p54, %p55
    %p57 = scmp.ne.s32.totalorder %s49, %s52
    %p58 = scmp.eq.s32.totalorder %s18, 0
    %p59 = por %p57, %p58
    %p60 = scmp.ne.s32.totalorder %s49, %s52
    %p61 = scmp.eq.s32.totalorder %s23, 1
    %p62 = por %p60, %p61
    %p63 = scmp.ne.s32.totalorder %s52, %s53
    %p64 = scmp.eq.s32.totalorder %s23, 0
    %p65 = por %p63, %p64
    %p66 = scmp.ne.s32.totalorder %s52, %s53
    %p67 = scmp.eq.s32.totalorder %s24, 1
    %p68 = por %p66, %p67
    %p70 = scmp.ne.s32.totalorder %s53, %s69
    %p71 = scmp.eq.s32.totalorder %s24, 0
    %p72 = por %p70, %p71
    %s74 = sadd.s32 %s73, 1
    %p77 = scmp.eq.s32.totalorder %s18, 1
    %p78 = scmp.ne.s32.totalorder %s73, %s75
    %p79 = scmp.eq.s32.totalorder %s18, 0
    %p80 = por %p78, %p79
    %p81 = scmp.ne.s32.totalorder %s73, %s75
    %p82 = scmp.eq.s32.totalorder %s23, 1
    %p83 = por %p81, %p82
    %p84 = scmp.ne.s32.totalorder %s75, %s76
    %p85 = scmp.eq.s32.totalorder %s23, 0
    %p86 = por %p84, %p85
    %p87 = scmp.ne.s32.totalorder %s75, %s76
    %p88 = scmp.eq.s32.totalorder %s24, 1
    %p89 = por %p87, %p88
    %p91 = scmp.ne.s32.totalorder %s76, %s90
    %p92 = scmp.eq.s32.totalorder %s24, 0
    %p93 = por %p91, %p92
    %s95 = sadd.s32 %s94, 1
    %p98 = scmp.eq.s32.totalorder %s18, 1
    %p99 = scmp.ne.s32.totalorder %s94, %s96
    %p100 = scmp.eq.s32.totalorder %s18, 0
    %p101 = por %p99, %p100
    %p102 = scmp.ne.s32.totalorder %s94, %s96
    %p103 = scmp.eq.s32.totalorder %s23, 1
    %p104 = por %p102, %p103
    %p105 = scmp.ne.s32.totalorder %s96, %s97
    %p106 = scmp.eq.s32.totalorder %s23, 0
    %p107 = por %p105, %p106
    %p108 = scmp.ne.s32.totalorder %s96, %s97
    %p109 = scmp.eq.s32.totalorder %s24, 1
    %p110 = por %p108, %p109
    %p112 = scmp.ne.s32.totalorder %s97, %s111
    %p113 = scmp.eq.s32.totalorder %s24, 0
    %p114 = por %p112, %p113
    %s116 = sadd.s32 %s115, 1
    %p119 = scmp.eq.s32.totalorder %s18, 1
    %p120 = scmp.ne.s32.totalorder %s115, %s117
    %p121 = scmp.eq.s32.totalorder %s18, 0
    %p122 = por %p120, %p121
    %p123 = scmp.ne.s32.totalorder %s115, %s117
    %p124 = scmp.eq.s32.totalorder %s23, 1
    %p125 = por %p123, %p124
    %p126 = scmp.ne.s32.totalorder %s117, %s118
    %p127 = scmp.eq.s32.totalorder %s23, 0
    %p128 = por %p126, %p127
    %p129 = scmp.ne.s32.totalorder %s117, %s118
    %p130 = scmp.eq.s32.totalorder %s24, 1
    %p131 = por %p129, %p130
    %p133 = scmp.ne.s32.totalorder %s118, %s132
    %p134 = scmp.eq.s32.totalorder %s24, 0
    %p135 = por %p133, %p134
    %s137 = sadd.s32 %s136, 1
    %p140 = scmp.eq.s32.totalorder %s18, 1
    %p141 = scmp.ne.s32.totalorder %s136, %s138
    %p142 = scmp.eq.s32.totalorder %s18, 0
    %p143 = por %p141, %p142
    %p144 = scmp.ne.s32.totalorder %s136, %s138
    %p145 = scmp.eq.s32.totalorder %s23, 1
    %p146 = por %p144, %p145
    %p147 = scmp.ne.s32.totalorder %s138, %s139
    %p148 = scmp.eq.s32.totalorder %s23, 0
    %p149 = por %p147, %p148
    %p150 = scmp.ne.s32.totalorder %s138, %s139
    %p151 = scmp.eq.s32.totalorder %s24, 1
    %p152 = por %p150, %p151
    %p154 = scmp.ne.s32.totalorder %s139, %s153
    %p155 = scmp.eq.s32.totalorder %s24, 0
    %p156 = por %p154, %p155
    %s158 = sadd.s32 %s157, 1
    %p161 = scmp.eq.s32.totalorder %s18, 1
    %p162 = scmp.ne.s32.totalorder %s157, %s159
    %p163 = scmp.eq.s32.totalorder %s18, 0
    %p164 = por %p162, %p163
    %p165 = scmp.ne.s32.totalorder %s157, %s159
    %p166 = scmp.eq.s32.totalorder %s23, 1
    %p167 = por %p165, %p166
    %p168 = scmp.ne.s32.totalorder %s159, %s160
    %p169 = scmp.eq.s32.totalorder %s23, 0
    %p170 = por %p168, %p169
    %p171 = scmp.ne.s32.totalorder %s159, %s160
    %p172 = scmp.eq.s32.totalorder %s24, 1
    %p173 = por %p171, %p172
    %p175 = scmp.ne.s32.totalorder %s160, %s174
    %p176 = scmp.eq.s32.totalorder %s24, 0
    %p177 = por %p175, %p176
    %s179 = sadd.s32 %s178, 1
    %p182 = scmp.eq.s32.totalorder %s18, 1
    %p183 = scmp.ne.s32.totalorder %s178, %s180
    %p184 = scmp.eq.s32.totalorder %s18, 0
    %p185 = por %p183, %p184
    %p186 = scmp.ne.s32.totalorder %s178, %s180
    %p187 = scmp.eq.s32.totalorder %s23, 1
    %p188 = por %p186, %p187
    %p189 = scmp.ne.s32.totalorder %s180, %s181
    %p190 = scmp.eq.s32.totalorder %s23, 0
    %p191 = por %p189, %p190
    %p192 = scmp.ne.s32.totalorder %s180, %s181
    %p193 = scmp.eq.s32.totalorder %s24, 1
    %p194 = por %p192, %p193
    %p196 = scmp.ne.s32.totalorder %s181, %s195
    %p197 = scmp.eq.s32.totalorder %s24, 0
    %p198 = por %p196, %p197
    %s200 = sadd.s32 %s199, 1
    %p203 = scmp.eq.s32.totalorder %s18, 1
    %p204 = scmp.ne.s32.totalorder %s199, %s201
    %p205 = scmp.eq.s32.totalorder %s18, 0
    %p206 = por %p204, %p205
    %p207 = scmp.ne.s32.totalorder %s199, %s201
    %p208 = scmp.eq.s32.totalorder %s23, 1
    %p209 = por %p207, %p208
    %p210 = scmp.ne.s32.totalorder %s201, %s202
    %p211 = scmp.eq.s32.totalorder %s23, 0
    %p212 = por %p210, %p211
    %p213 = scmp.ne.s32.totalorder %s201, %s202
    %p214 = scmp.eq.s32.totalorder %s24, 1
    %p215 = por %p213, %p214
    %p217 = scmp.ne.s32.totalorder %s202, %s216
    %p218 = scmp.eq.s32.totalorder %s24, 0
    %p219 = por %p217, %p218
    %s221 = sadd.s32 %s220, 1
    %p224 = scmp.eq.s32.totalorder %s18, 1
    %p225 = scmp.ne.s32.totalorder %s220, %s222
    %p226 = scmp.eq.s32.totalorder %s18, 0
    %p227 = por %p225, %p226
    %p228 = scmp.ne.s32.totalorder %s220, %s222
    %p229 = scmp.eq.s32.totalorder %s23, 1
    %p230 = por %p228, %p229
    %p231 = scmp.ne.s32.totalorder %s222, %s223
    %p232 = scmp.eq.s32.totalorder %s23, 0
    %p233 = por %p231, %p232
    %p234 = scmp.ne.s32.totalorder %s222, %s223
    %p235 = scmp.eq.s32.totalorder %s24, 1
    %p236 = por %p234, %p235
    %p238 = scmp.ne.s32.totalorder %s223, %s237
    %p239 = scmp.eq.s32.totalorder %s24, 0
    %p240 = por %p238, %p239
    %s242 = sadd.s32 %s241, 1
    %p245 = scmp.eq.s32.totalorder %s18, 1
    %p246 = scmp.ne.s32.totalorder %s241, %s243
    %p247 = scmp.eq.s32.totalorder %s18, 0
    %p248 = por %p246, %p247
    %p249 = scmp.ne.s32.totalorder %s241, %s243
    %p250 = scmp.eq.s32.totalorder %s23, 1
    %p251 = por %p249, %p250
    %p252 = scmp.ne.s32.totalorder %s243, %s244
    %p253 = scmp.eq.s32.totalorder %s23, 0
    %p254 = por %p252, %p253
    %p255 = scmp.ne.s32.totalorder %s243, %s244
    %p256 = scmp.eq.s32.totalorder %s24, 1
    %p257 = por %p255, %p256
    %p259 = scmp.ne.s32.totalorder %s244, %s258
    %p260 = scmp.eq.s32.totalorder %s24, 0
    %p261 = por %p259, %p260
    %s262 = ssub.s32 %s18, %s25
    %p263 = scmp.eq.s32.totalorder %s262, 0
    %s265 = sadd.s32 %s264, 1
    %s266 = scalar_select %p263, %s264, %s265
    %p269 = pneg %p263
    %p270 = scmp.eq.s32.totalorder %s18, 1
    %p271 = por %p269, %p270
    %p272 = scmp.ne.s32.totalorder %s264, %s267
    %p273 = scmp.eq.s32.totalorder %s18, 0
    %p274 = por %p272, %p273
    %p275 = scmp.ne.s32.totalorder %s264, %s267
    %p276 = scmp.eq.s32.totalorder %s23, 1
    %p277 = por %p275, %p276
    %p278 = scmp.ne.s32.totalorder %s267, %s268
    %p279 = scmp.eq.s32.totalorder %s23, 0
    %p280 = por %p278, %p279
    %p281 = scmp.ne.s32.totalorder %s267, %s268
    %p282 = scmp.eq.s32.totalorder %s24, 1
    %p283 = por %p281, %p282
    %p285 = scmp.ne.s32.totalorder %s268, %s284
    %p286 = scmp.eq.s32.totalorder %s24, 0
    %p287 = por %p285, %p286
    %p288 = scmp.le.s32.totalorder 1, %s18
    %p289 = scmp.lt.s32.totalorder %s18, 3
    %p290 = pnand %p288, %p289
    %p291 = pneg %p290
    // Predicated region
    $region9: #{tpu_custom_call.1} parent=5 // pred_check
      _
    $region10: #{tpu_custom_call.1} parent=5 // pred_check_branch
      %293 = sbr.rel (%p290) target = $region12
    $region11: #{tpu_custom_call.1} parent=5 // pred_region
      %s294 = ssub.s32 %s18, 1
      // Predicated region
      $region13: #{tpu_custom_call.1} parent=11 // pred_check
        %p295 = pneg %p39
      $region14: #{tpu_custom_call.1} parent=11 // pred_check_branch
        %297 = sbr.rel (%p295) target = $region16
      $region15: #{tpu_custom_call.1} parent=11 // pred_region
        _
      $region16: #{tpu_custom_call.1} parent=11 // pred_fallthru
        _
      // Predicated region
      $region17: #{tpu_custom_call.1} parent=11 // pred_check
        %p298 = pneg %p86
      $region18: #{tpu_custom_call.1} parent=11 // pred_check_branch
        %300 = sbr.rel (%p298) target = $region20
      $region19: #{tpu_custom_call.1} parent=11 // pred_region
        _
      $region20: #{tpu_custom_call.1} parent=11 // pred_fallthru
        _
      // Predicated region
      $region21: #{tpu_custom_call.1} parent=11 // pred_check
        %p301 = pneg %p107
      $region22: #{tpu_custom_call.1} parent=11 // pred_check_branch
        %303 = sbr.rel (%p301) target = $region24
      $region23: #{tpu_custom_call.1} parent=11 // pred_region
        _
      $region24: #{tpu_custom_call.1} parent=11 // pred_fallthru
        _
      // Predicated region
      $region25: #{tpu_custom_call.1} parent=11 // pred_check
        %p304 = pneg %p128
      $region26: #{tpu_custom_call.1} parent=11 // pred_check_branch
        %306 = sbr.rel (%p304) target = $region28
      $region27: #{tpu_custom_call.1} parent=11 // pred_region
        _
      $region28: #{tpu_custom_call.1} parent=11 // pred_fallthru
        _
      // Predicated region
      $region29: #{tpu_custom_call.1} parent=11 // pred_check
        %p307 = pneg %p149
      $region30: #{tpu_custom_call.1} parent=11 // pred_check_branch
        %309 = sbr.rel (%p307) target = $region32
      $region31: #{tpu_custom_call.1} parent=11 // pred_region
        _
      $region32: #{tpu_custom_call.1} parent=11 // pred_fallthru
        _
      // Predicated region
      $region33: #{tpu_custom_call.1} parent=11 // pred_check
        %p310 = pneg %p170
      $region34: #{tpu_custom_call.1} parent=11 // pred_check_branch
        %312 = sbr.rel (%p310) target = $region36
      $region35: #{tpu_custom_call.1} parent=11 // pred_region
        _
      $region36: #{tpu_custom_call.1} parent=11 // pred_fallthru
        _
      // Predicated region
      $region37: #{tpu_custom_call.1} parent=11 // pred_check
        %p313 = pneg %p191
      $region38: #{tpu_custom_call.1} parent=11 // pred_check_branch
        %315 = sbr.rel (%p313) target = $region40
      $region39: #{tpu_custom_call.1} parent=11 // pred_region
        _
      $region40: #{tpu_custom_call.1} parent=11 // pred_fallthru
        _
      // Predicated region
      $region41: #{tpu_custom_call.1} parent=11 // pred_check
        %p316 = pneg %p212
      $region42: #{tpu_custom_call.1} parent=11 // pred_check_branch
        %318 = sbr.rel (%p316) target = $region44
      $region43: #{tpu_custom_call.1} parent=11 // pred_region
        _
      $region44: #{tpu_custom_call.1} parent=11 // pred_fallthru
        _
      // Predicated region
      $region45: #{tpu_custom_call.1} parent=11 // pred_check
        %p319 = pneg %p233
      $region46: #{tpu_custom_call.1} parent=11 // pred_check_branch
        %321 = sbr.rel (%p319) target = $region48
      $region47: #{tpu_custom_call.1} parent=11 // pred_region
        _
      $region48: #{tpu_custom_call.1} parent=11 // pred_fallthru
        _
      // Predicated region
      $region49: #{tpu_custom_call.1} parent=11 // pred_check
        %p322 = pneg %p254
      $region50: #{tpu_custom_call.1} parent=11 // pred_check_branch
        %324 = sbr.rel (%p322) target = $region52
      $region51: #{tpu_custom_call.1} parent=11 // pred_region
        _
      $region52: #{tpu_custom_call.1} parent=11 // pred_fallthru
        _
    $region12: #{tpu_custom_call.1} parent=5 // pred_fallthru
      _
    %p325 = scmp.lt.s32.totalorder %s18, 2
    // Predicated region
    $region53: #{tpu_custom_call.1} parent=5 // pred_check
      %p326 = pneg %p325
    $region54: #{tpu_custom_call.1} parent=5 // pred_check_branch
      %328 = sbr.rel (%p326) target = $region56
    $region55: #{tpu_custom_call.1} parent=5 // pred_region
      // Predicated region
      $region57: #{tpu_custom_call.1} parent=55 // pred_check
        %p329 = pneg %p59
      $region58: #{tpu_custom_call.1} parent=55 // pred_check_branch
        %331 = sbr.rel (%p329) target = $region60
      $region59: #{tpu_custom_call.1} parent=55 // pred_region
        %p332 = scmp.lt.s32.totalorder %s18, 1
        %s333 = scalar_select %p332, %s18, 1
        %s334 = smul.addr %s333, 4
        %s335 = smul.addr %s334, 8
        %s336 = scalar_lea.vmem %s1, %s335
      $region60: #{tpu_custom_call.1} parent=55 // pred_fallthru
        _
    $region56: #{tpu_custom_call.1} parent=5 // pred_fallthru
      _
    %p337 = scmp.le.s32.totalorder 1, %s18
    %p338 = scmp.lt.s32.totalorder %s18, 3
    %p339 = pnand %p337, %p338
    %p340 = pneg %p339
    // Predicated region
    $region61: #{tpu_custom_call.1} parent=5 // pred_check
      _
    $region62: #{tpu_custom_call.1} parent=5 // pred_check_branch
      %342 = sbr.rel (%p339) target = $region64
    $region63: #{tpu_custom_call.1} parent=5 // pred_region
      %s343 = ssub.s32 %s18, 1
      %p344 = pneg %p39
      %p345 = pneg %p36
      %p346 = scmp.lt.s32.totalorder %s23, 1
      %s347 = scalar_select %p346, %s23, 1
      %s348 = smul.addr %s347, 4
      %s349 = smul.addr %s348, 8
      %s350 = scalar_lea.vmem %s1, %s349
      %p351 = pneg %p65
      %p352 = pneg %p62
      %p353 = pneg %p86
      %p354 = pneg %p83
      %p355 = pneg %p107
      %p356 = pneg %p104
      %p357 = pneg %p128
      %p358 = pneg %p125
      %p359 = pneg %p149
      %p360 = pneg %p146
      %p361 = pneg %p170
      %p362 = pneg %p167
      %p363 = pneg %p191
      %p364 = pneg %p188
      %p365 = pneg %p212
      %p366 = pneg %p209
      %p367 = pneg %p233
      %p368 = pneg %p230
      %p369 = pneg %p254
      %p370 = pneg %p251
      %p371 = pneg %p280
      %p372 = pneg %p277
      %p373 = scmp.lt.s32.totalorder %s23, 1
      %s374 = scalar_select %p373, %s23, 1
      %s375 = smul.addr %s374, 4
      %s376 = smul.addr %s375, 8
      %s377 = scalar_lea.vmem %s11, %s376
      %p378 = scmp.lt.s32.totalorder %s23, 1
      %s379 = scalar_select %p378, %s23, 1
      %s380 = smul.addr %s379, 4
      %s381 = smul.addr %s380, 8
      %s382 = scalar_lea.vmem %s1, %s381
      %p383 = scmp.lt.s32.totalorder %s23, 1
      %s384 = scalar_select %p383, %s23, 1
      %s385 = smul.addr %s384, 4
      %s386 = smul.addr %s385, 8
      %s387 = scalar_lea.vmem %s11, %s386
      %v389 = vld [vmem:[%s382] sm:$0xff]
      %v390 = vld [vmem:[%s382 + $0x8] sm:$0xff]
      %v391 = vld [vmem:[%s382 + $0x10] sm:$0xff]
      %v392 = vld [vmem:[%s382 + $0x18] sm:$0xff]
      %393 = vxpose.xlu0.b32.start [1/16] %v389, 128
      %394 = vxpose.xlu0.b32.cont [2/16] %v390, 128
      %395 = vxpose.xlu0.b32.cont [3/16] %v391, 128
      %396 = vxpose.xlu0.b32.cont [4/16] %v392, 128
      %397 = vxpose.xlu0.b32.cont [5/16] 0.0, 128
      %398 = vxpose.xlu0.b32.cont [6/16] 0.0, 128
      %399 = vxpose.xlu0.b32.cont [7/16] 0.0, 128
      %400 = vxpose.xlu0.b32.cont [8/16] 0.0, 128
      %401 = vxpose.xlu0.b32.cont [9/16] 0.0, 128
      %402 = vxpose.xlu0.b32.cont [10/16] 0.0, 128
      %403 = vxpose.xlu0.b32.cont [11/16] 0.0, 128
      %404 = vxpose.xlu0.b32.cont [12/16] 0.0, 128
      %405 = vxpose.xlu0.b32.cont [13/16] 0.0, 128
      %406 = vxpose.xlu0.b32.cont [14/16] 0.0, 128
      %407 = vxpose.xlu0.b32.cont [15/16] 0.0, 128
      %408 = vxpose.xlu0.b32.end [16/16] 0.0, 128
      %v409 = vpop.trf.xlu0
      %v410 = vpop.trf.xlu0
      %v411 = vpop.trf.xlu0
      %v412 = vpop.trf.xlu0
      %v413 = vpop.trf.xlu0
      %v414 = vpop.trf.xlu0
      %v415 = vpop.trf.xlu0
      %v416 = vpop.trf.xlu0
      %v417 = vpop.trf.xlu0
      %v418 = vpop.trf.xlu0
      %v419 = vpop.trf.xlu0
      %v420 = vpop.trf.xlu0
      %v421 = vpop.trf.xlu0
      %v422 = vpop.trf.xlu0
      %v423 = vpop.trf.xlu0
      %v424 = vpop.trf.xlu0
      %v425 = vpack.c.bf16 %v410, %v409
      %v426 = vld [vmem:[%s2] sm:$0xf]
      %v427 = vld [vmem:[%s2 + $0x4] sm:$0xf]
      %v428 = vld [vmem:[%s2 + $0x8] sm:$0xf]
      %v429 = vld [vmem:[%s2 + $0xc] sm:$0xf]
      %v434 = vunpack.c.l.b16 %v426
      %v435 = vunpack.c.l.b16 %v427
      %v436 = vunpack.c.l.b16 %v428
      %v437 = vunpack.c.l.b16 %v429
      %v438 = vpack.c.b16 %v435, %v434
      %v439 = vpack.c.b16 %v437, %v436
      %vm442 = vcmask 261120
      %v444 = vsel %vm442, %v425, 0
      %446 = vmatprep.subr.bf16.mxu0 0
      %447 = vmatpush1.bf16.msra.mxu0 0
      %448 = vmatprep.subr.bf16.mxu0 0
      %449 = vmatpush1.bf16.msra.mxu0 0
      %450 = vmatprep.subr.bf16.mxu0 0
      %451 = vmatpush1.bf16.msra.mxu0 0
      %452 = vmatprep.subr.bf16.mxu0 0
      %453 = vmatpush1.bf16.msra.mxu0 0
      %454 = vmatprep.subr.bf16.mxu0 0
      %455 = vmatpush1.bf16.msra.mxu0 0
      %456 = vmatprep.subr.bf16.mxu0 0
      %457 = vmatpush1.bf16.msra.mxu0 0
      %458 = vmatprep.subr.bf16.mxu0 0
      %459 = vmatpush1.bf16.msra.mxu0 %v439
      %460 = vmatprep.subr.bf16.mxu0 0
      %461 = vmatpush1.bf16.msra.mxu0 %v438
      %462 = vmatprep.subr.bf16.mxu0 0
      %463 = vmatpush2.bf16.msra.mxu0 0
      %464 = vmatprep.subr.bf16.mxu0 0
      %465 = vmatpush2.bf16.msra.mxu0 0
      %466 = vmatprep.subr.bf16.mxu0 0
      %467 = vmatpush2.bf16.msra.mxu0 0
      %468 = vmatprep.subr.bf16.mxu0 0
      %469 = vmatpush2.bf16.msra.mxu0 0
      %470 = vmatprep.subr.bf16.mxu0 0
      %471 = vmatpush2.bf16.msra.mxu0 0
      %472 = vmatprep.subr.bf16.mxu0 0
      %473 = vmatpush2.bf16.msra.mxu0 0
      %474 = vmatprep.subr.bf16.mxu0 0
      %475 = vmatpush2.bf16.msra.mxu0 0
      %476 = vmatprep.subr.bf16.mxu0 0
      %477 = vmatpush2.bf16.msra.mxu0 0
      %478 = vmatprep.mubr.bf16.mxu0 0
      %479 = vmatmul.mubr.bf16.gmra.mxu0 %v444
      %v480 = vpop.f32.mrf.mxu0
      %v481 = vadd.f32 0.0, %v480
      %v482 = vpop.f32.mrf.mxu0
      %v483 = vpop.f32.mrf.mxu0
      %v484 = vadd.f32 0.0, %v483
      %v485 = vpop.f32.mrf.mxu0
      %486 = vdwg.mxu0
      %v487 = vmax.f32 %v481, 0.0
      %v488 = vmax.f32 %v484, 0.0
      %v489 = vld [vmem:[%s3] sm:$0x1]
      %v491 = vlaneseq
      %v492 = vshrl.u32 %v491, 7
      %v493 = vsub.s32 0, %v492
      %v494 = vrot.slane %v489, %v493
      %v496 = vadd.f32 %v487, %v494
      %v497 = vadd.f32 %v488, %v494
      %v498 = vlaneseq
      %v499 = vshrl.u32 %v498, 7
      %v500 = vadd.s32 %v499, 8
      %v501 = vld [vmem:[%s4 + $0x2] sm:$0x1]
      %v502 = vlaneseq
      %v503 = vshrl.u32 %v502, 7
      %v504 = vsub.s32 0, %v503
      %v505 = vrot.slane %v501, %v504
      %v506 = vmul.f32 %v496, %v505
      %v507 = vmul.f32 %v497, %v505
      %v508 = vrot.slane %v496, 6
      %v509 = vrot.slane %v497, 6
      %vm510 = vcmp.lt.s32.totalorder %v499, 2
      %v511 = vsel %vm510, %v508, %v509
      %v512 = vsel %vm510, %v509, %v508
      %v513 = vadd.s32 %v499, 4294967294
      %v514 = vadd.s32 %v500, 4294967294
      %vm515 = vcmp.ge.s32.totalorder %v513, 0
      %vm516 = vcmp.ge.s32.totalorder %v514, 0
      %vm517 = vcmp.lt.s32.totalorder %v513, 16
      %vm518 = vcmp.lt.s32.totalorder %v514, 16
      %vm519 = vmand %vm515, %vm517
      %vm520 = vmand %vm516, %vm518
      %v521 = vsel %vm519, 1, 0
      %v522 = vsel %vm520, 1, 0
      %vm523 = vcmp.eq.s32.totalorder %v521, 1
      %vm524 = vcmp.eq.s32.totalorder %v522, 1
      %v525 = vsel %vm523, %v512, 0.0
      %v526 = vsel %vm524, %v511, 0.0
      %v527 = vld [vmem:[%s4] sm:$0x1]
      %v528 = vlaneseq
      %v529 = vshrl.u32 %v528, 7
      %v530 = vsub.s32 0, %v529
      %v531 = vrot.slane %v527, %v530
      %v532 = vmul.f32 %v525, %v531
      %v533 = vmul.f32 %v526, %v531
      %v534 = vadd.f32 %v506, %v532
      %v535 = vadd.f32 %v507, %v533
      %v536 = vrot.slane %v496, 7
      %v537 = vrot.slane %v497, 7
      %vm538 = vcmp.lt.s32.totalorder %v499, 1
      %v539 = vsel %vm538, %v536, %v537
      %v540 = vsel %vm538, %v537, %v536
      %v541 = vadd.s32 %v499, 4294967295
      %v542 = vadd.s32 %v500, 4294967295
      %vm543 = vcmp.ge.s32.totalorder %v541, 0
      %vm544 = vcmp.ge.s32.totalorder %v542, 0
      %vm545 = vcmp.lt.s32.totalorder %v541, 16
      %vm546 = vcmp.lt.s32.totalorder %v542, 16
      %vm547 = vmand %vm543, %vm545
      %vm548 = vmand %vm544, %vm546
      %v549 = vsel %vm547, 1, 0
      %v550 = vsel %vm548, 1, 0
      %vm551 = vcmp.eq.s32.totalorder %v549, 1
      %vm552 = vcmp.eq.s32.totalorder %v550, 1
      %v553 = vsel %vm551, %v540, 0.0
      %v554 = vsel %vm552, %v539, 0.0
      %v555 = vld [vmem:[%s4 + $0x1] sm:$0x1]
      %v556 = vlaneseq
      %v557 = vshrl.u32 %v556, 7
      %v558 = vsub.s32 0, %v557
      %v559 = vrot.slane %v555, %v558
      %v560 = vmul.f32 %v553, %v559
      %v561 = vmul.f32 %v554, %v559
      %v562 = vadd.f32 %v534, %v560
      %v563 = vadd.f32 %v535, %v561
      %v564 = vrot.slane %v496, 1
      %v565 = vrot.slane %v497, 1
      %vm566 = vcmp.lt.s32.totalorder %v499, 7
      %v567 = vsel %vm566, %v564, %v565
      %v568 = vsel %vm566, %v565, %v564
      %v569 = vadd.s32 %v499, 1
      %v570 = vadd.s32 %v500, 1
      %vm571 = vcmp.ge.s32.totalorder %v569, 0
      %vm572 = vcmp.ge.s32.totalorder %v570, 0
      %vm573 = vcmp.lt.s32.totalorder %v569, 16
      %vm574 = vcmp.lt.s32.totalorder %v570, 16
      %vm575 = vmand %vm571, %vm573
      %vm576 = vmand %vm572, %vm574
      %v577 = vsel %vm575, 1, 0
      %v578 = vsel %vm576, 1, 0
      %vm579 = vcmp.eq.s32.totalorder %v577, 1
      %vm580 = vcmp.eq.s32.totalorder %v578, 1
      %v581 = vsel %vm579, %v567, 0.0
      %v582 = vsel %vm580, %v568, 0.0
      %v583 = vld [vmem:[%s4 + $0x3] sm:$0x1]
      %v584 = vlaneseq
      %v585 = vshrl.u32 %v584, 7
      %v586 = vsub.s32 0, %v585
      %v587 = vrot.slane %v583, %v586
      %v588 = vmul.f32 %v581, %v587
      %v589 = vmul.f32 %v582, %v587
      %v590 = vadd.f32 %v562, %v588
      %v591 = vadd.f32 %v563, %v589
      %v592 = vrot.slane %v496, 2
      %v593 = vrot.slane %v497, 2
      %vm594 = vcmp.lt.s32.totalorder %v499, 6
      %v595 = vsel %vm594, %v592, %v593
      %v596 = vsel %vm594, %v593, %v592
      %v597 = vadd.s32 %v499, 2
      %v598 = vadd.s32 %v500, 2
      %vm599 = vcmp.ge.s32.totalorder %v597, 0
      %vm600 = vcmp.ge.s32.totalorder %v598, 0
      %vm601 = vcmp.lt.s32.totalorder %v597, 16
      %vm602 = vcmp.lt.s32.totalorder %v598, 16
      %vm603 = vmand %vm599, %vm601
      %vm604 = vmand %vm600, %vm602
      %v605 = vsel %vm603, 1, 0
      %v606 = vsel %vm604, 1, 0
      %vm607 = vcmp.eq.s32.totalorder %v605, 1
      %vm608 = vcmp.eq.s32.totalorder %v606, 1
      %v609 = vsel %vm607, %v595, 0.0
      %v610 = vsel %vm608, %v596, 0.0
      %v611 = vld [vmem:[%s4 + $0x4] sm:$0x1]
      %v612 = vlaneseq
      %v613 = vshrl.u32 %v612, 7
      %v614 = vsub.s32 0, %v613
      %v615 = vrot.slane %v611, %v614
      %v616 = vmul.f32 %v609, %v615
      %v617 = vmul.f32 %v610, %v615
      %v618 = vadd.f32 %v590, %v616
      %v619 = vadd.f32 %v591, %v617
      %v620 = vmax.f32 %v618, 0.0
      %v621 = vmax.f32 %v619, 0.0
      %v622 = vpack.c.bf16 %v621, %v620
      %v623 = vld [vmem:[%s5] sm:$0xf]
      %v624 = vld [vmem:[%s5 + $0x4] sm:$0xf]
      %v625 = vld [vmem:[%s5 + $0x8] sm:$0xf]
      %v626 = vld [vmem:[%s5 + $0xc] sm:$0xf]
      %v627 = vld [vmem:[%s5 + $0x10] sm:$0xf]
      %v628 = vld [vmem:[%s5 + $0x14] sm:$0xf]
      %v629 = vld [vmem:[%s5 + $0x18] sm:$0xf]
      %v630 = vld [vmem:[%s5 + $0x1c] sm:$0xf]
      %v631 = vld [vmem:[%s6] sm:$0x1]
      %v633 = vlaneseq
      %v634 = vshrl.u32 %v633, 7
      %v635 = vsub.s32 0, %v634
      %v636 = vrot.slane %v631, %v635
      %v646 = vunpack.c.l.b16 %v623
      %v647 = vunpack.c.l.b16 %v624
      %v648 = vunpack.c.l.b16 %v625
      %v649 = vunpack.c.l.b16 %v626
      %v650 = vunpack.c.l.b16 %v627
      %v651 = vunpack.c.l.b16 %v628
      %v652 = vunpack.c.l.b16 %v629
      %v653 = vunpack.c.l.b16 %v630
      %v654 = vpack.c.b16 %v647, %v646
      %v655 = vpack.c.b16 %v649, %v648
      %v656 = vpack.c.b16 %v651, %v650
      %v657 = vpack.c.b16 %v653, %v652
      %vm662 = vcmask 523264
      %v664 = vsel %vm662, %v622, 0
      %666 = vmatprep.subr.bf16.mxu0 0
      %667 = vmatpush1.bf16.msra.mxu0 0
      %668 = vmatprep.subr.bf16.mxu0 0
      %669 = vmatpush1.bf16.msra.mxu0 0
      %670 = vmatprep.subr.bf16.mxu0 0
      %671 = vmatpush1.bf16.msra.mxu0 0
      %672 = vmatprep.subr.bf16.mxu0 0
      %673 = vmatpush1.bf16.msra.mxu0 0
      %674 = vmatprep.subr.bf16.mxu0 0
      %675 = vmatpush1.bf16.msra.mxu0 %v657
      %676 = vmatprep.subr.bf16.mxu0 0
      %677 = vmatpush1.bf16.msra.mxu0 %v656
      %678 = vmatprep.subr.bf16.mxu0 0
      %679 = vmatpush1.bf16.msra.mxu0 %v655
      %680 = vmatprep.subr.bf16.mxu0 0
      %681 = vmatpush1.bf16.msra.mxu0 %v654
      %682 = vmatprep.subr.bf16.mxu0 0
      %683 = vmatpush2.bf16.msra.mxu0 0
      %684 = vmatprep.subr.bf16.mxu0 0
      %685 = vmatpush2.bf16.msra.mxu0 0
      %686 = vmatprep.subr.bf16.mxu0 0
      %687 = vmatpush2.bf16.msra.mxu0 0
      %688 = vmatprep.subr.bf16.mxu0 0
      %689 = vmatpush2.bf16.msra.mxu0 0
      %690 = vmatprep.subr.bf16.mxu0 0
      %691 = vmatpush2.bf16.msra.mxu0 0
      %692 = vmatprep.subr.bf16.mxu0 0
      %693 = vmatpush2.bf16.msra.mxu0 0
      %694 = vmatprep.subr.bf16.mxu0 0
      %695 = vmatpush2.bf16.msra.mxu0 0
      %696 = vmatprep.subr.bf16.mxu0 0
      %697 = vmatpush2.bf16.msra.mxu0 0
      %698 = vmatprep.mubr.bf16.mxu0 0
      %699 = vmatmul.mubr.bf16.gmra.mxu0 %v664
      %v700 = vpop.f32.mrf.mxu0
      %v701 = vadd.f32 %v636, %v700
      %v702 = vpop.f32.mrf.mxu0
      %v703 = vpop.f32.mrf.mxu0
      %v704 = vadd.f32 %v636, %v703
      %v705 = vpop.f32.mrf.mxu0
      %706 = vdwg.mxu0
      %v707 = vsel %vm442, %v701, 0.0
      %v708 = vsel %vm442, %v704, 0.0
      %v709 = vadd.f32 %v707, %v708
      %v710 = vrot.slane %v709, 4
      %v711 = vadd.f32 %v709, %v710
      %v712 = vrot.slane %v711, 2
      %v713 = vadd.f32 %v711, %v712
      %v714 = vrot.slane %v713, 1
      %v715 = vadd.f32 %v713, %v714
      %v716 = vrcp.pop 16.0
      %v717 = vmul.f32 %v715, %v716
      %v718 = vld [vmem:[%s7] sm:$0xff]
      %v719 = vld [vmem:[%s7 + $0x8] sm:$0xff]
      %v720 = vld [vmem:[%s7 + $0x10] sm:$0xff]
      %v721 = vld [vmem:[%s7 + $0x18] sm:$0xff]
      %v722 = vld [vmem:[%s8] sm:$0x1]
      %v724 = vsel %vm442, %v717, 0
      %726 = vmatprep.subr.mxu0 0.0
      %727 = vmatpush1.msra.mxu0 0.0
      %728 = vmatprep.subr.mxu0 0.0
      %729 = vmatpush1.msra.mxu0 0.0
      %730 = vmatprep.subr.mxu0 0.0
      %731 = vmatpush1.msra.mxu0 0.0
      %732 = vmatprep.subr.mxu0 0.0
      %733 = vmatpush1.msra.mxu0 0.0
      %734 = vmatprep.subr.mxu0 0.0
      %735 = vmatpush1.msra.mxu0 0.0
      %736 = vmatprep.subr.mxu0 0.0
      %737 = vmatpush1.msra.mxu0 0.0
      %738 = vmatprep.subr.mxu0 0.0
      %739 = vmatpush1.msra.mxu0 0.0
      %740 = vmatprep.subr.mxu0 0.0
      %741 = vmatpush1.msra.mxu0 0.0
      %742 = vmatprep.subr.mxu0 0.0
      %743 = vmatpush1.msra.mxu0 0.0
      %744 = vmatprep.subr.mxu0 0.0
      %745 = vmatpush1.msra.mxu0 0.0
      %746 = vmatprep.subr.mxu0 0.0
      %747 = vmatpush1.msra.mxu0 0.0
      %748 = vmatprep.subr.mxu0 0.0
      %749 = vmatpush1.msra.mxu0 0.0
      %750 = vmatprep.subr.mxu0 0.0
      %751 = vmatpush1.msra.mxu0 %v721
      %752 = vmatprep.subr.mxu0 0.0
      %753 = vmatpush1.msra.mxu0 %v720
      %754 = vmatprep.subr.mxu0 0.0
      %755 = vmatpush1.msra.mxu0 %v719
      %756 = vmatprep.subr.mxu0 0.0
      %757 = vmatpush1.msra.mxu0 %v718
      %758 = vmatprep.subr.mxu0 0.0
      %759 = vmatpush2.msra.mxu0 0.0
      %760 = vmatprep.subr.mxu0 0.0
      %761 = vmatpush2.msra.mxu0 0.0
      %762 = vmatprep.subr.mxu0 0.0
      %763 = vmatpush2.msra.mxu0 0.0
      %764 = vmatprep.subr.mxu0 0.0
      %765 = vmatpush2.msra.mxu0 0.0
      %766 = vmatprep.subr.mxu0 0.0
      %767 = vmatpush2.msra.mxu0 0.0
      %768 = vmatprep.subr.mxu0 0.0
      %769 = vmatpush2.msra.mxu0 0.0
      %770 = vmatprep.subr.mxu0 0.0
      %771 = vmatpush2.msra.mxu0 0.0
      %772 = vmatprep.subr.mxu0 0.0
      %773 = vmatpush2.msra.mxu0 0.0
      %774 = vmatprep.subr.mxu0 0.0
      %775 = vmatpush2.msra.mxu0 0.0
      %776 = vmatprep.subr.mxu0 0.0
      %777 = vmatpush2.msra.mxu0 0.0
      %778 = vmatprep.subr.mxu0 0.0
      %779 = vmatpush2.msra.mxu0 0.0
      %780 = vmatprep.subr.mxu0 0.0
      %781 = vmatpush2.msra.mxu0 0.0
      %782 = vmatprep.subr.mxu0 0.0
      %783 = vmatpush2.msra.mxu0 0.0
      %784 = vmatprep.subr.mxu0 0.0
      %785 = vmatpush2.msra.mxu0 0.0
      %786 = vmatprep.subr.mxu0 0.0
      %787 = vmatpush2.msra.mxu0 0.0
      %788 = vmatprep.subr.mxu0 0.0
      %789 = vmatpush2.msra.mxu0 0.0
      %790 = vmatprep.mubr.f32.mxu0 0.0
      %791 = vmatmul.mubr.f32.gmra.mxu0 %v724
      %v792 = vpop.f32.mrf.mxu0
      %v793 = vadd.f32 %v722, %v792
      %v794 = vpop.f32.mrf.mxu0
      %795 = vdwg.mxu0
      %v796 = vmax.f32 %v793, 0.0
      %v797 = vld [vmem:[%s9] sm:$0xf]
      %v798 = vld [vmem:[%s10] sm:$0x1]
      %vm799 = vcmask 31744
      %v801 = vsel %vm799, %v796, 0
      %vm803 = vcmask 1043456
      %v805 = vsel %vm803, %v797, 0
      %807 = vmatprep.subr.mxu0 0.0
      %808 = vmatpush1.msra.mxu0 0.0
      %809 = vmatprep.subr.mxu0 0.0
      %810 = vmatpush1.msra.mxu0 0.0
      %811 = vmatprep.subr.mxu0 0.0
      %812 = vmatpush1.msra.mxu0 0.0
      %813 = vmatprep.subr.mxu0 0.0
      %814 = vmatpush1.msra.mxu0 0.0
      %815 = vmatprep.subr.mxu0 0.0
      %816 = vmatpush1.msra.mxu0 0.0
      %817 = vmatprep.subr.mxu0 0.0
      %818 = vmatpush1.msra.mxu0 0.0
      %819 = vmatprep.subr.mxu0 0.0
      %820 = vmatpush1.msra.mxu0 0.0
      %821 = vmatprep.subr.mxu0 0.0
      %822 = vmatpush1.msra.mxu0 0.0
      %823 = vmatprep.subr.mxu0 0.0
      %824 = vmatpush1.msra.mxu0 0.0
      %825 = vmatprep.subr.mxu0 0.0
      %826 = vmatpush1.msra.mxu0 0.0
      %827 = vmatprep.subr.mxu0 0.0
      %828 = vmatpush1.msra.mxu0 0.0
      %829 = vmatprep.subr.mxu0 0.0
      %830 = vmatpush1.msra.mxu0 0.0
      %831 = vmatprep.subr.mxu0 0.0
      %832 = vmatpush1.msra.mxu0 0.0
      %833 = vmatprep.subr.mxu0 0.0
      %834 = vmatpush1.msra.mxu0 0.0
      %835 = vmatprep.subr.mxu0 0.0
      %836 = vmatpush1.msra.mxu0 0.0
      %837 = vmatprep.subr.mxu0 0.0
      %838 = vmatpush1.msra.mxu0 %v805
      %839 = vmatprep.subr.mxu0 0.0
      %840 = vmatpush2.msra.mxu0 0.0
      %841 = vmatprep.subr.mxu0 0.0
      %842 = vmatpush2.msra.mxu0 0.0
      %843 = vmatprep.subr.mxu0 0.0
      %844 = vmatpush2.msra.mxu0 0.0
      %845 = vmatprep.subr.mxu0 0.0
      %846 = vmatpush2.msra.mxu0 0.0
      %847 = vmatprep.subr.mxu0 0.0
      %848 = vmatpush2.msra.mxu0 0.0
      %849 = vmatprep.subr.mxu0 0.0
      %850 = vmatpush2.msra.mxu0 0.0
      %851 = vmatprep.subr.mxu0 0.0
      %852 = vmatpush2.msra.mxu0 0.0
      %853 = vmatprep.subr.mxu0 0.0
      %854 = vmatpush2.msra.mxu0 0.0
      %855 = vmatprep.subr.mxu0 0.0
      %856 = vmatpush2.msra.mxu0 0.0
      %857 = vmatprep.subr.mxu0 0.0
      %858 = vmatpush2.msra.mxu0 0.0
      %859 = vmatprep.subr.mxu0 0.0
      %860 = vmatpush2.msra.mxu0 0.0
      %861 = vmatprep.subr.mxu0 0.0
      %862 = vmatpush2.msra.mxu0 0.0
      %863 = vmatprep.subr.mxu0 0.0
      %864 = vmatpush2.msra.mxu0 0.0
      %865 = vmatprep.subr.mxu0 0.0
      %866 = vmatpush2.msra.mxu0 0.0
      %867 = vmatprep.subr.mxu0 0.0
      %868 = vmatpush2.msra.mxu0 0.0
      %869 = vmatprep.subr.mxu0 0.0
      %870 = vmatpush2.msra.mxu0 0.0
      %871 = vmatprep.mubr.f32.mxu0 0.0
      %872 = vmatmul.mubr.f32.gmra.mxu0 %v801
      %v873 = vpop.f32.mrf.mxu0
      %v874 = vadd.f32 %v798, %v873
      %v875 = vpop.f32.mrf.mxu0
      %876 = vdwg.mxu0
      %v877 = vxor.u32 %v874, 2147483648
      %v878 = vmul.f32 %v877, 1.442695
      %v879 = vpow.pop %v878
      %v880 = vadd.f32 %v879, 1.0
      %v881 = vrcp.pop %v880
      %v882 = vmul.f32 1.0, %v881
      %s883 = sld [smem:[#allocation2]]
      %v884 = vstv %s883
      %v885 = vmul.f32 %v882, %v884
      %v886 = vlaneseq
      %v887 = vshrl.u32 %v886, 7
      %v888 = vsub.s32 0, %v887
      %v889 = vrot.slane %v885, %v888
      %v890 = vmul.f32 %v701, %v889
      %v891 = vmul.f32 %v704, %v889
      %892 = vxpose.xlu0.b32.start [1/16] %v890, 128
      %893 = vxpose.xlu0.b32.cont [2/16] %v891, 128
      %894 = vxpose.xlu0.b32.cont [3/16] 0.0, 128
      %895 = vxpose.xlu0.b32.cont [4/16] 0.0, 128
      %896 = vxpose.xlu0.b32.cont [5/16] 0.0, 128
      %897 = vxpose.xlu0.b32.cont [6/16] 0.0, 128
      %898 = vxpose.xlu0.b32.cont [7/16] 0.0, 128
      %899 = vxpose.xlu0.b32.cont [8/16] 0.0, 128
      %900 = vxpose.xlu0.b32.cont [9/16] 0.0, 128
      %901 = vxpose.xlu0.b32.cont [10/16] 0.0, 128
      %902 = vxpose.xlu0.b32.cont [11/16] 0.0, 128
      %903 = vxpose.xlu0.b32.cont [12/16] 0.0, 128
      %904 = vxpose.xlu0.b32.cont [13/16] 0.0, 128
      %905 = vxpose.xlu0.b32.cont [14/16] 0.0, 128
      %906 = vxpose.xlu0.b32.cont [15/16] 0.0, 128
      %907 = vxpose.xlu0.b32.end [16/16] 0.0, 128
      %v908 = vpop.trf.xlu0
      %v909 = vpop.trf.xlu0
      %v910 = vpop.trf.xlu0
      %v911 = vpop.trf.xlu0
      %v912 = vpop.trf.xlu0
      %v913 = vpop.trf.xlu0
      %v914 = vpop.trf.xlu0
      %v915 = vpop.trf.xlu0
      %v916 = vpop.trf.xlu0
      %v917 = vpop.trf.xlu0
      %v918 = vpop.trf.xlu0
      %v919 = vpop.trf.xlu0
      %v920 = vpop.trf.xlu0
      %v921 = vpop.trf.xlu0
      %v922 = vpop.trf.xlu0
      %v923 = vpop.trf.xlu0
      %v924 = vadd.f32 %v389, %v908
      %v925 = vadd.f32 %v390, %v909
      %v926 = vadd.f32 %v391, %v910
      %v927 = vadd.f32 %v392, %v911
      %vm928 = vcmask 130048
      %929 = vst.msk [vmem:[%s387] sm:$0xff] %vm928, %v924
      %930 = vst.msk [vmem:[%s387 + $0x8] sm:$0xff] %vm928, %v925
      %931 = vst.msk [vmem:[%s387 + $0x10] sm:$0xff] %vm928, %v926
      %932 = vst.msk [vmem:[%s387 + $0x18] sm:$0xff] %vm928, %v927
      %p933 = scmp.lt.s32.totalorder %s23, 1
      %s934 = scalar_select %p933, %s23, 1
      %s935 = smul.addr %s934, 4
      %s936 = smul.addr %s935, 8
      %s937 = scalar_lea.vmem %s11, %s936
      // Predicated region
      $region65: #{tpu_custom_call.1} parent=63 // pred_check
        %p938 = pneg %p277
      $region66: #{tpu_custom_call.1} parent=63 // pred_check_branch
        %940 = sbr.rel (%p938) target = $region68
      $region67: #{tpu_custom_call.1} parent=63 // pred_region
        _
      $region68: #{tpu_custom_call.1} parent=63 // pred_fallthru
        _
    $region64: #{tpu_custom_call.1} parent=5 // pred_fallthru
      _
    %p941 = scmp.le.s32.totalorder 2, %s18
    // Predicated region
    $region69: #{tpu_custom_call.1} parent=5 // pred_check
      %p942 = pneg %p941
    $region70: #{tpu_custom_call.1} parent=5 // pred_check_branch
      %944 = sbr.rel (%p942) target = $region72
    $region71: #{tpu_custom_call.1} parent=5 // pred_region
      %s945 = ssub.s32 %s18, 2
      // Predicated region
      $region73: #{tpu_custom_call.1} parent=71 // pred_check
        %p946 = pneg %p283
      $region74: #{tpu_custom_call.1} parent=71 // pred_check_branch
        %948 = sbr.rel (%p946) target = $region76
      $region75: #{tpu_custom_call.1} parent=71 // pred_region
        %p949 = scmp.lt.s32.totalorder %s24, 1
        %s950 = scalar_select %p949, %s24, 1
        %s951 = smul.addr %s950, 4
        %s952 = smul.addr %s951, 8
        %s953 = scalar_lea.vmem %s11, %s952
      $region76: #{tpu_custom_call.1} parent=71 // pred_fallthru
        _
    $region72: #{tpu_custom_call.1} parent=5 // pred_fallthru
      _
  $region6: #{tpu_custom_call.1} parent=0 // loop_footer
    %s22 = sadd.s32 1, %s18
  $region7: #{tpu_custom_call.1} parent=0 // loop_footer_branch
    %17 = sbr.rel target = $region3
  $region8: #{tpu_custom_call.1} parent=0 // loop_exit
    _

</llo_original>
